<compile_context>
chip_gen: v6e
topology: v6e:2x2x1
jax: 0.10.0
libtpu: 0.0.40
codegen_flags: <defaults>
</compile_context>

<pallas_src>
import functools

import jax
import jax.numpy as jnp
from jax.experimental import pallas as pl
from jax.experimental.pallas import tpu as pltpu


_TB_MAX = 2048          # max batch-tile (lane-axis) size per grid step
_MIN_SPLIT_BATCH = 256  # on multi-TC chips, split batches >= this across cores


def _round_up(v, m):
    return ((v + m - 1) // m) * m


def _tensorcores_per_chip():
    """Best-effort detection of TensorCores per chip (2 on v7x, else 1)."""
    try:
        kind = jax.devices()[0].device_kind.lower()
        if "v7" in kind or "7x" in kind:
            return 2
    except Exception:
        pass
    return 1


def _act(activation, h):
    if activation == "tanh":
        return jnp.tanh(h)
    if activation == "sigmoid":
        return jax.nn.sigmoid(h)
    # relu / unknown -> ReLU (matches the PyTorch module's act_map fallback)
    return jnp.maximum(h, 0.0)


def _dot(mode, a, b):
    """MXU matmul with selectable precision (f32 accumulation in all modes).

    "bf16"   : operands cast to bf16, 1 MXU pass        (fastest)
    "3pass"  : bf16_3x decomposition, 3 MXU passes      (default, ~f32 accurate)
    "highest": f32 operands, Precision.HIGHEST          (strict f32 parity)
    """
    if mode == "highest":
        return jnp.dot(a.astype(jnp.float32), b.astype(jnp.float32),
                       preferred_element_type=jnp.float32,
                       precision=jax.lax.Precision.HIGHEST)
    if mode == "bf16":
        return jnp.dot(a.astype(jnp.bfloat16), b.astype(jnp.bfloat16),
                       preferred_element_type=jnp.float32)
    # "3pass": a ~= a_hi + a_lo (bf16 each); drop only the tiny a_lo@b_lo term.
    a = a.astype(jnp.float32)
    b = b.astype(jnp.float32)
    a_hi = a.astype(jnp.bfloat16)
    b_hi = b.astype(jnp.bfloat16)
    a_lo = (a - a_hi.astype(jnp.float32)).astype(jnp.bfloat16)
    b_lo = (b - b_hi.astype(jnp.float32)).astype(jnp.bfloat16)
    dot = functools.partial(jnp.dot, preferred_element_type=jnp.float32)
    return dot(a_hi, b_hi) + dot(a_hi, b_lo) + dot(a_lo, b_hi)


def _mlp_kernel(activation, mode,
                xt_ref, w1_ref, b1_ref, w2_ref, b2_ref, w3_ref, b3_ref,
                ot_ref):
    """Fused feature-major MLP forward for one batch tile.

    xt_ref : (D_in, TB) tile of x^T            (streams per grid step)
    w*/b*  : full weights (out, in) / (out, 1) biases (VMEM-resident)
    ot_ref : (n_out, TB) tile of y^T           (lane-dense unmasked stores)
    """
    xt = xt_ref[...]                                            # (D_in, TB) f32
    # Layer 1: (H1, D_in) @ (D_in, TB) -> (H1, TB)
    h = _act(activation, _dot(mode, w1_ref[...], xt) + b1_ref[...])
    # Layer 2: (H2, H1) @ (H1, TB) -> (H2, TB)
    h = _act(activation, _dot(mode, w2_ref[...], h) + b2_ref[...])
    # Output layer: (n_out, H2) @ (H2, TB) -> (n_out, TB), no activation.
    out = _dot(mode, w3_ref[...], h) + b3_ref[...]
    ot_ref[...] = out.astype(ot_ref.dtype)


def multi_output_surrogate_net(x, params, activation="relu", *,
                               matmul_precision="3pass"):
    """Pallas forward pass equivalent to MultiOutputSurrogateNet.forward.

    x:      (batch, input_dim) float32
    params: dict with PyTorch-layout weights w1 (H1,D_in), w2 (H2,H1),
            w3 (n_out,H2) and column biases b1 (H1,1), b2 (H2,1), b3 (n_out,1)
    returns (batch, n_outputs) float32
    """
    activation = activation.lower()
    batch, d_in = x.shape
    h1 = params["w1"].shape[0]
    h2 = params["w2"].shape[0]
    n_out = params["w3"].shape[0]

    w1, b1 = params["w1"], params["b1"]
    w2, b2 = params["w2"], params["b2"]
    w3, b3 = params["w3"], params["b3"]

    # ---- batch tiling: minimal padding, even split on multi-TC chips -------
    num_tc = _tensorcores_per_chip()
    grid_n = pl.cdiv(batch, _TB_MAX)
    if num_tc > 1 and batch >= _MIN_SPLIT_BATCH:
        grid_n = _round_up(max(grid_n, num_tc), num_tc)   # even work per core

    if grid_n == 1:
        tb = batch                      # block == full array -> no padding
        padded = batch
    else:
        tb = _round_up(pl.cdiv(batch, grid_n), 128)       # lane axis: x128
        padded = grid_n * tb

    xt = x.astype(jnp.float32).T                          # (D_in, batch)
    if padded != batch:
        xt = jnp.pad(xt, ((0, 0), (0, padded - batch)))   # < 128 cols per step

    kernel = functools.partial(_mlp_kernel, activation, matmul_precision)

    out_t = pl.pallas_call(
        kernel,
        out_shape=jax.ShapeDtypeStruct((n_out, padded), jnp.float32),
        grid=(grid_n,),
        in_specs=[
            pl.BlockSpec((d_in, tb), lambda i: (0, i)),    # x^T: streams per tile
            pl.BlockSpec((h1, d_in), lambda i: (0, 0)),    # weights / biases:
            pl.BlockSpec((h1, 1), lambda i: (0, 0)),       #   VMEM-resident
            pl.BlockSpec((h2, h1), lambda i: (0, 0)),
            pl.BlockSpec((h2, 1), lambda i: (0, 0)),
            pl.BlockSpec((n_out, h2), lambda i: (0, 0)),
            pl.BlockSpec((n_out, 1), lambda i: (0, 0)),
        ],
        out_specs=pl.BlockSpec((n_out, tb), lambda i: (0, i)),
        compiler_params=pltpu.CompilerParams(
            dimension_semantics=("parallel",),             # megacore on v7x
            vmem_limit_bytes=32 * 1024 * 1024,
        ),
    )(xt, w1, b1, w2, b2, w3, b3)

    if padded != batch:
        out_t = out_t[:, :batch]
    return out_t.T                                         # (batch, n_out)


def init_params(key, input_dim, hidden_layers, n_outputs):
    """PyTorch-like uniform fan-in init.  Weights stored in nn.Linear's native
    (out, in) layout; biases as (out, 1) columns (feature-major friendly)."""
    dims = [input_dim] + list(hidden_layers) + [n_outputs]
    params = {}
    for i in range(len(dims) - 1):
        key, kw, kb = jax.random.split(key, 3)
        bound = 1.0 / (dims[i] ** 0.5)
        params[f"w{i+1}"] = jax.random.uniform(
            kw, (dims[i + 1], dims[i]), jnp.float32, -bound, bound)
        params[f"b{i+1}"] = jax.random.uniform(
            kb, (dims[i + 1], 1), jnp.float32, -bound, bound)
    return params


def reference_forward(x, params, activation="relu"):
    """Pure-JAX reference (HIGHEST-precision f32 dots, PyTorch semantics)."""
    act = {"relu": lambda v: jnp.maximum(v, 0.0),
           "tanh": jnp.tanh,
           "sigmoid": jax.nn.sigmoid}.get(activation.lower(),
                                          lambda v: jnp.maximum(v, 0.0))
    prec = jax.lax.Precision.HIGHEST
    h = act(jnp.dot(x, params["w1"].T, precision=prec) + params["b1"][:, 0])
    h = act(jnp.dot(h, params["w2"].T, precision=prec) + params["b2"][:, 0])
    return jnp.dot(h, params["w3"].T, precision=prec) + params["b3"][:, 0]


if __name__ == "__main__":
    # Shapes consistent with the module's docstring example:
    # input_dim=16, hidden_layers=[64, 32], n_outputs=4.
    input_dim, hidden_layers, n_outputs = 16, [64, 32], 4

    key = jax.random.PRNGKey(0)
    key, kx_small, kx_big = jax.random.split(key, 3)
    params = init_params(key, input_dim, hidden_layers, n_outputs)

    # 1) Tiny batch -> single grid step (blocks == full arrays, no padding).
    x_small = jax.random.normal(kx_small, (2, input_dim), dtype=jnp.float32)
    out_small = jax.block_until_ready(
        multi_output_surrogate_net(x_small, params, "relu"))
    ref_small = reference_forward(x_small, params, "relu")
    assert out_small.shape == (2, n_outputs)
    # default "3pass" matmuls are within ~1e-4 of true-f32; use a safe margin.
    assert jnp.allclose(out_small, ref_small, atol=5e-4, rtol=5e-4), \
        "small-batch mismatch vs reference"

    # 2) Ragged batch > _TB_MAX -> multi-step grid + <128-row padding path.
    big_batch = 2600
    x_big = jax.random.normal(kx_big, (big_batch, input_dim), dtype=jnp.float32)
    out_big = jax.block_until_ready(
        multi_output_surrogate_net(x_big, params, "tanh"))
    ref_big = reference_forward(x_big, params, "tanh")
    assert out_big.shape == (big_batch, n_outputs)
    assert jnp.allclose(out_big, ref_big, atol=5e-4, rtol=5e-4), \
        "tiled-batch mismatch vs reference"

    # 3) Strict f32-parity mode still available.
    out_exact = jax.block_until_ready(
        multi_output_surrogate_net(x_small, params, "relu",
                                   matmul_precision="highest"))
    assert jnp.allclose(out_exact, ref_small, atol=1e-5, rtol=1e-5), \
        "highest-precision mismatch vs reference"

    print("KERNEL_OK")
</pallas_src>

<mosaic_0001>
module attributes {stable_mosaic.version = 11 : i64} {
  func.func @_mlp_kernel(%arg0: i32, %arg1: memref<16x2xf32, #tpu.memory_space<vmem>>, %arg2: memref<64x16xf32, #tpu.memory_space<vmem>>, %arg3: memref<64x1xf32, #tpu.memory_space<vmem>>, %arg4: memref<32x64xf32, #tpu.memory_space<vmem>>, %arg5: memref<32x1xf32, #tpu.memory_space<vmem>>, %arg6: memref<4x32xf32, #tpu.memory_space<vmem>>, %arg7: memref<4x1xf32, #tpu.memory_space<vmem>>, %arg8: memref<4x2xf32, #tpu.memory_space<vmem>>) attributes {dimension_semantics = [#tpu.dimension_semantics<parallel>], iteration_bounds = array<i64: 1>, scalar_prefetch = 0 : i64, scratch_operands = 0 : i64, tpu.core_type = #tpu.core_type<tc>, window_params = [{transform_indices = @transform_0, window_bounds = array<i64: 16, 2>}, {pipeline_mode = #tpu.pipeline_mode<synchronous>, transform_indices = @transform_1, window_bounds = array<i64: 64, 16>}, {pipeline_mode = #tpu.pipeline_mode<synchronous>, transform_indices = @transform_2, window_bounds = array<i64: 64, 1>}, {pipeline_mode = #tpu.pipeline_mode<synchronous>, transform_indices = @transform_3, window_bounds = array<i64: 32, 64>}, {pipeline_mode = #tpu.pipeline_mode<synchronous>, transform_indices = @transform_4, window_bounds = array<i64: 32, 1>}, {pipeline_mode = #tpu.pipeline_mode<synchronous>, transform_indices = @transform_5, window_bounds = array<i64: 4, 32>}, {pipeline_mode = #tpu.pipeline_mode<synchronous>, transform_indices = @transform_6, window_bounds = array<i64: 4, 1>}, {transform_indices = @transform_7, window_bounds = array<i64: 4, 2>}]} {
    %c0 = arith.constant 0 : index
    %c0_0 = arith.constant 0 : index
    %0 = vector.load %arg1[%c0, %c0_0] : memref<16x2xf32, #tpu.memory_space<vmem>>, vector<16x2xf32>
    %c0_1 = arith.constant 0 : index
    %c0_2 = arith.constant 0 : index
    %1 = vector.load %arg2[%c0_1, %c0_2] : memref<64x16xf32, #tpu.memory_space<vmem>>, vector<64x16xf32>
    %2 = arith.truncf %1 : vector<64x16xf32> to vector<64x16xbf16>
    %3 = arith.truncf %0 : vector<16x2xf32> to vector<16x2xbf16>
    %4 = arith.extf %2 : vector<64x16xbf16> to vector<64x16xf32>
    %5 = arith.subf %1, %4 : vector<64x16xf32>
    %6 = arith.truncf %5 : vector<64x16xf32> to vector<64x16xbf16>
    %7 = arith.extf %3 : vector<16x2xbf16> to vector<16x2xf32>
    %8 = arith.subf %0, %7 : vector<16x2xf32>
    %9 = arith.truncf %8 : vector<16x2xf32> to vector<16x2xbf16>
    %cst = arith.constant dense<0.000000e+00> : vector<64x2xf32>
    %10 = tpu.matmul %2, %3, %cst {dimension_numbers = #tpu.dot_dimension_numbers<[1], [0], [0], [1], [0, 0, 1, 1], [], []>} : vector<64x16xbf16>, vector<16x2xbf16>, vector<64x2xf32> -> vector<64x2xf32>
    %cst_3 = arith.constant dense<0.000000e+00> : vector<64x2xf32>
    %11 = tpu.matmul %2, %9, %cst_3 {dimension_numbers = #tpu.dot_dimension_numbers<[1], [0], [0], [1], [0, 0, 1, 1], [], []>} : vector<64x16xbf16>, vector<16x2xbf16>, vector<64x2xf32> -> vector<64x2xf32>
    %12 = arith.addf %10, %11 : vector<64x2xf32>
    %cst_4 = arith.constant dense<0.000000e+00> : vector<64x2xf32>
    %13 = tpu.matmul %6, %3, %cst_4 {dimension_numbers = #tpu.dot_dimension_numbers<[1], [0], [0], [1], [0, 0, 1, 1], [], []>} : vector<64x16xbf16>, vector<16x2xbf16>, vector<64x2xf32> -> vector<64x2xf32>
    %14 = arith.addf %12, %13 : vector<64x2xf32>
    %c0_5 = arith.constant 0 : index
    %c0_6 = arith.constant 0 : index
    %15 = vector.load %arg3[%c0_5, %c0_6] : memref<64x1xf32, #tpu.memory_space<vmem>>, vector<64x1xf32>
    %16 = vector.broadcast %15 : vector<64x1xf32> to vector<64x2xf32>
    %17 = arith.addf %14, %16 : vector<64x2xf32>
    %cst_7 = arith.constant 0.000000e+00 : f32
    %18 = vector.broadcast %cst_7 : f32 to vector<64x2xf32>
    %19 = arith.maximumf %17, %18 : vector<64x2xf32>
    %c0_8 = arith.constant 0 : index
    %c0_9 = arith.constant 0 : index
    %20 = vector.load %arg4[%c0_8, %c0_9] : memref<32x64xf32, #tpu.memory_space<vmem>>, vector<32x64xf32>
    %21 = arith.truncf %20 : vector<32x64xf32> to vector<32x64xbf16>
    %22 = arith.truncf %19 : vector<64x2xf32> to vector<64x2xbf16>
    %23 = arith.extf %21 : vector<32x64xbf16> to vector<32x64xf32>
    %24 = arith.subf %20, %23 : vector<32x64xf32>
    %25 = arith.truncf %24 : vector<32x64xf32> to vector<32x64xbf16>
    %26 = arith.extf %22 : vector<64x2xbf16> to vector<64x2xf32>
    %27 = arith.subf %19, %26 : vector<64x2xf32>
    %28 = arith.truncf %27 : vector<64x2xf32> to vector<64x2xbf16>
    %cst_10 = arith.constant dense<0.000000e+00> : vector<32x2xf32>
    %29 = tpu.matmul %21, %22, %cst_10 {dimension_numbers = #tpu.dot_dimension_numbers<[1], [0], [0], [1], [0, 0, 1, 1], [], []>} : vector<32x64xbf16>, vector<64x2xbf16>, vector<32x2xf32> -> vector<32x2xf32>
    %cst_11 = arith.constant dense<0.000000e+00> : vector<32x2xf32>
    %30 = tpu.matmul %21, %28, %cst_11 {dimension_numbers = #tpu.dot_dimension_numbers<[1], [0], [0], [1], [0, 0, 1, 1], [], []>} : vector<32x64xbf16>, vector<64x2xbf16>, vector<32x2xf32> -> vector<32x2xf32>
    %31 = arith.addf %29, %30 : vector<32x2xf32>
    %cst_12 = arith.constant dense<0.000000e+00> : vector<32x2xf32>
    %32 = tpu.matmul %25, %22, %cst_12 {dimension_numbers = #tpu.dot_dimension_numbers<[1], [0], [0], [1], [0, 0, 1, 1], [], []>} : vector<32x64xbf16>, vector<64x2xbf16>, vector<32x2xf32> -> vector<32x2xf32>
    %33 = arith.addf %31, %32 : vector<32x2xf32>
    %c0_13 = arith.constant 0 : index
    %c0_14 = arith.constant 0 : index
    %34 = vector.load %arg5[%c0_13, %c0_14] : memref<32x1xf32, #tpu.memory_space<vmem>>, vector<32x1xf32>
    %35 = vector.broadcast %34 : vector<32x1xf32> to vector<32x2xf32>
    %36 = arith.addf %33, %35 : vector<32x2xf32>
    %cst_15 = arith.constant 0.000000e+00 : f32
    %37 = vector.broadcast %cst_15 : f32 to vector<32x2xf32>
    %38 = arith.maximumf %36, %37 : vector<32x2xf32>
    %c0_16 = arith.constant 0 : index
    %c0_17 = arith.constant 0 : index
    %39 = vector.load %arg6[%c0_16, %c0_17] : memref<4x32xf32, #tpu.memory_space<vmem>>, vector<4x32xf32>
    %40 = arith.truncf %39 : vector<4x32xf32> to vector<4x32xbf16>
    %41 = arith.truncf %38 : vector<32x2xf32> to vector<32x2xbf16>
    %42 = arith.extf %40 : vector<4x32xbf16> to vector<4x32xf32>
    %43 = arith.subf %39, %42 : vector<4x32xf32>
    %44 = arith.truncf %43 : vector<4x32xf32> to vector<4x32xbf16>
    %45 = arith.extf %41 : vector<32x2xbf16> to vector<32x2xf32>
    %46 = arith.subf %38, %45 : vector<32x2xf32>
    %47 = arith.truncf %46 : vector<32x2xf32> to vector<32x2xbf16>
    %cst_18 = arith.constant dense<0.000000e+00> : vector<4x2xf32>
    %48 = tpu.matmul %40, %41, %cst_18 {dimension_numbers = #tpu.dot_dimension_numbers<[1], [0], [0], [1], [0, 0, 1, 1], [], []>} : vector<4x32xbf16>, vector<32x2xbf16>, vector<4x2xf32> -> vector<4x2xf32>
    %cst_19 = arith.constant dense<0.000000e+00> : vector<4x2xf32>
    %49 = tpu.matmul %40, %47, %cst_19 {dimension_numbers = #tpu.dot_dimension_numbers<[1], [0], [0], [1], [0, 0, 1, 1], [], []>} : vector<4x32xbf16>, vector<32x2xbf16>, vector<4x2xf32> -> vector<4x2xf32>
    %50 = arith.addf %48, %49 : vector<4x2xf32>
    %cst_20 = arith.constant dense<0.000000e+00> : vector<4x2xf32>
    %51 = tpu.matmul %44, %41, %cst_20 {dimension_numbers = #tpu.dot_dimension_numbers<[1], [0], [0], [1], [0, 0, 1, 1], [], []>} : vector<4x32xbf16>, vector<32x2xbf16>, vector<4x2xf32> -> vector<4x2xf32>
    %52 = arith.addf %50, %51 : vector<4x2xf32>
    %c0_21 = arith.constant 0 : index
    %c0_22 = arith.constant 0 : index
    %53 = vector.load %arg7[%c0_21, %c0_22] : memref<4x1xf32, #tpu.memory_space<vmem>>, vector<4x1xf32>
    %54 = vector.broadcast %53 : vector<4x1xf32> to vector<4x2xf32>
    %55 = arith.addf %52, %54 : vector<4x2xf32>
    %c0_23 = arith.constant 0 : index
    %c0_24 = arith.constant 0 : index
    %56 = vector.load %arg8[%c0_23, %c0_24] : memref<4x2xf32, #tpu.memory_space<vmem>>, vector<4x2xf32>
    tpu.vector_store %arg8[%c0_23, %c0_24], %55 {strides = array<i32>} : memref<4x2xf32, #tpu.memory_space<vmem>>, vector<4x2xf32>,
    return
  }
  func.func @transform_0(%arg0: i32) -> (i32, i32) {
    %c0_i32 = arith.constant 0 : i32
    %c0_i32_0 = arith.constant 0 : i32
    return %c0_i32, %arg0 : i32, i32
  }
  func.func @transform_1(%arg0: i32) -> (i32, i32) {
    %c0_i32 = arith.constant 0 : i32
    %c0_i32_0 = arith.constant 0 : i32
    %c0_i32_1 = arith.constant 0 : i32
    return %c0_i32, %c0_i32_0 : i32, i32
  }
  func.func @transform_2(%arg0: i32) -> (i32, i32) {
    %c0_i32 = arith.constant 0 : i32
    %c0_i32_0 = arith.constant 0 : i32
    %c0_i32_1 = arith.constant 0 : i32
    return %c0_i32, %c0_i32_0 : i32, i32
  }
  func.func @transform_3(%arg0: i32) -> (i32, i32) {
    %c0_i32 = arith.constant 0 : i32
    %c0_i32_0 = arith.constant 0 : i32
    %c0_i32_1 = arith.constant 0 : i32
    return %c0_i32, %c0_i32_0 : i32, i32
  }
  func.func @transform_4(%arg0: i32) -> (i32, i32) {
    %c0_i32 = arith.constant 0 : i32
    %c0_i32_0 = arith.constant 0 : i32
    %c0_i32_1 = arith.constant 0 : i32
    return %c0_i32, %c0_i32_0 : i32, i32
  }
  func.func @transform_5(%arg0: i32) -> (i32, i32) {
    %c0_i32 = arith.constant 0 : i32
    %c0_i32_0 = arith.constant 0 : i32
    %c0_i32_1 = arith.constant 0 : i32
    return %c0_i32, %c0_i32_0 : i32, i32
  }
  func.func @transform_6(%arg0: i32) -> (i32, i32) {
    %c0_i32 = arith.constant 0 : i32
    %c0_i32_0 = arith.constant 0 : i32
    %c0_i32_1 = arith.constant 0 : i32
    return %c0_i32, %c0_i32_0 : i32, i32
  }
  func.func @transform_7(%arg0: i32) -> (i32, i32) {
    %c0_i32 = arith.constant 0 : i32
    %c0_i32_0 = arith.constant 0 : i32
    return %c0_i32, %arg0 : i32, i32
  }
}

</mosaic_0001>

<llo_original>
// kernel: tpu_custom_call.1
$region0: #{tpu_custom_call.1}
  #allocation0 [shape = 'u32[]', space=smem, size = 0x4, offset = 0x4, fixed_abs, tag = 'smem constant byte address 0x4 - core index']
  #allocation1 [shape = 'u32[144,128]{1,0:T(1,128)}', space=vmem, size = 0x12000, scoped, tag = 'internal scratch']
  %s0 = inlined_call_operand.vmem [shape: f32[16,2], index: 0, kind: input, shape index: {}]
  %s1 = inlined_call_operand.vmem [shape: f32[64,16], index: 1, kind: input, shape index: {}]
  %s2 = inlined_call_operand.vmem [shape: f32[64,1], index: 2, kind: input, shape index: {}]
  %s3 = inlined_call_operand.vmem [shape: f32[32,64], index: 3, kind: input, shape index: {}]
  %s4 = inlined_call_operand.vmem [shape: f32[32,1], index: 4, kind: input, shape index: {}]
  %s5 = inlined_call_operand.vmem [shape: f32[4,32], index: 5, kind: input, shape index: {}]
  %s6 = inlined_call_operand.vmem [shape: f32[4,1], index: 6, kind: input, shape index: {}]
  %s7 = inlined_call_operand.vmem [shape: f32[4,2], index: 7, kind: output, shape index: {}]
  %s8 = sld [smem:[#allocation0]]
  $region38: #{tpu_custom_call.1} parent=0
    _
  %s10 = ssub.s32 1, %s8
  %s11 = scalar_select 0, %s10, %s8
  // Predicated region
  $region2: #{tpu_custom_call.1} parent=0 // pred_check
    _
  $region3: #{tpu_custom_call.1} parent=0 // pred_check_branch
    %13 = sbr.rel (0) target = $region5
  $region4: #{tpu_custom_call.1} parent=0 // pred_region
    _
  $region5: #{tpu_custom_call.1} parent=0 // pred_fallthru
    _
  // Predicated region
  $region6: #{tpu_custom_call.1} parent=0 // pred_check
    _
  $region7: #{tpu_custom_call.1} parent=0 // pred_check_branch
    %15 = sbr.rel (0) target = $region9
  $region8: #{tpu_custom_call.1} parent=0 // pred_region
    _
  $region9: #{tpu_custom_call.1} parent=0 // pred_fallthru
    _
  // Predicated region
  $region10: #{tpu_custom_call.1} parent=0 // pred_check
    _
  $region11: #{tpu_custom_call.1} parent=0 // pred_check_branch
    %17 = sbr.rel (0) target = $region13
  $region12: #{tpu_custom_call.1} parent=0 // pred_region
    _
  $region13: #{tpu_custom_call.1} parent=0 // pred_fallthru
    _
  // Predicated region
  $region14: #{tpu_custom_call.1} parent=0 // pred_check
    _
  $region15: #{tpu_custom_call.1} parent=0 // pred_check_branch
    %19 = sbr.rel (0) target = $region17
  $region16: #{tpu_custom_call.1} parent=0 // pred_region
    _
  $region17: #{tpu_custom_call.1} parent=0 // pred_fallthru
    _
  // Predicated region
  $region18: #{tpu_custom_call.1} parent=0 // pred_check
    _
  $region19: #{tpu_custom_call.1} parent=0 // pred_check_branch
    %21 = sbr.rel (0) target = $region21
  $region20: #{tpu_custom_call.1} parent=0 // pred_region
    _
  $region21: #{tpu_custom_call.1} parent=0 // pred_fallthru
    _
  // Predicated region
  $region22: #{tpu_custom_call.1} parent=0 // pred_check
    _
  $region23: #{tpu_custom_call.1} parent=0 // pred_check_branch
    %23 = sbr.rel (0) target = $region25
  $region24: #{tpu_custom_call.1} parent=0 // pred_region
    _
  $region25: #{tpu_custom_call.1} parent=0 // pred_fallthru
    _
  // Predicated region
  $region26: #{tpu_custom_call.1} parent=0 // pred_check
    _
  $region27: #{tpu_custom_call.1} parent=0 // pred_check_branch
    %25 = sbr.rel (0) target = $region29
  $region28: #{tpu_custom_call.1} parent=0 // pred_region
    _
  $region29: #{tpu_custom_call.1} parent=0 // pred_fallthru
    _
  %v27 = vld [vmem:[%s0] sm:$0xff]
  %v28 = vld [vmem:[%s0 + $0x8] sm:$0xff]
  %v29 = vld [vmem:[%s1] sm:$0xff]
  %v30 = vld [vmem:[%s1 + $0x8] sm:$0xff]
  %v31 = vld [vmem:[%s1 + $0x10] sm:$0xff]
  %v32 = vld [vmem:[%s1 + $0x18] sm:$0xff]
  %v33 = vld [vmem:[%s1 + $0x20] sm:$0xff]
  %v34 = vld [vmem:[%s1 + $0x28] sm:$0xff]
  %v35 = vld [vmem:[%s1 + $0x30] sm:$0xff]
  %v36 = vld [vmem:[%s1 + $0x38] sm:$0xff]
  %v37 = vpack.c.bf16 %v30, %v29
  %v38 = vpack.c.bf16 %v32, %v31
  %v39 = vpack.c.bf16 %v34, %v33
  %v40 = vpack.c.bf16 %v36, %v35
  %v41 = vpack.c.bf16 %v28, %v27
  %v42 = vunpack.c.l.bf16 %v37
  %v43 = vunpack.c.h.bf16 %v37
  %v44 = vunpack.c.l.bf16 %v38
  %v45 = vunpack.c.h.bf16 %v38
  %v46 = vunpack.c.l.bf16 %v39
  %v47 = vunpack.c.h.bf16 %v39
  %v48 = vunpack.c.l.bf16 %v40
  %v49 = vunpack.c.h.bf16 %v40
  %v50 = vsub.f32 %v29, %v42
  %v51 = vsub.f32 %v30, %v43
  %v52 = vsub.f32 %v31, %v44
  %v53 = vsub.f32 %v32, %v45
  %v54 = vsub.f32 %v33, %v46
  %v55 = vsub.f32 %v34, %v47
  %v56 = vsub.f32 %v35, %v48
  %v57 = vsub.f32 %v36, %v49
  %v58 = vpack.c.bf16 %v51, %v50
  %v59 = vpack.c.bf16 %v53, %v52
  %v60 = vpack.c.bf16 %v55, %v54
  %v61 = vpack.c.bf16 %v57, %v56
  %v62 = vunpack.c.l.bf16 %v41
  %v63 = vunpack.c.h.bf16 %v41
  %v64 = vsub.f32 %v27, %v62
  %v65 = vsub.f32 %v28, %v63
  %v66 = vpack.c.bf16 %v65, %v64
  %vm67 = vcmask 130048
  %v69 = vsel %vm67, %v37, 0
  %v72 = vsel %vm67, %v38, 0
  %v75 = vsel %vm67, %v39, 0
  %v78 = vsel %vm67, %v40, 0
  %80 = vmatprep.subr.bf16.mxu0 0
  %81 = vmatpush1.bf16.msra.mxu0 0
  %82 = vmatprep.subr.bf16.mxu0 0
  %83 = vmatpush1.bf16.msra.mxu0 0
  %84 = vmatprep.subr.bf16.mxu0 0
  %85 = vmatpush1.bf16.msra.mxu0 0
  %86 = vmatprep.subr.bf16.mxu0 0
  %87 = vmatpush1.bf16.msra.mxu0 0
  %88 = vmatprep.subr.bf16.mxu0 0
  %89 = vmatpush1.bf16.msra.mxu0 0
  %90 = vmatprep.subr.bf16.mxu0 0
  %91 = vmatpush1.bf16.msra.mxu0 0
  %92 = vmatprep.subr.bf16.mxu0 0
  %93 = vmatpush1.bf16.msra.mxu0 0
  %94 = vmatprep.subr.bf16.mxu0 0
  %95 = vmatpush1.bf16.msra.mxu0 %v66
  %96 = vmatprep.subr.bf16.mxu0 0
  %97 = vmatpush2.bf16.msra.mxu0 0
  %98 = vmatprep.subr.bf16.mxu0 0
  %99 = vmatpush2.bf16.msra.mxu0 0
  %100 = vmatprep.subr.bf16.mxu0 0
  %101 = vmatpush2.bf16.msra.mxu0 0
  %102 = vmatprep.subr.bf16.mxu0 0
  %103 = vmatpush2.bf16.msra.mxu0 0
  %104 = vmatprep.subr.bf16.mxu0 0
  %105 = vmatpush2.bf16.msra.mxu0 0
  %106 = vmatprep.subr.bf16.mxu0 0
  %107 = vmatpush2.bf16.msra.mxu0 0
  %108 = vmatprep.subr.bf16.mxu0 0
  %109 = vmatpush2.bf16.msra.mxu0 0
  %110 = vmatprep.subr.bf16.mxu0 0
  %111 = vmatpush2.bf16.msra.mxu0 0
  %112 = vmatprep.mubr.bf16.mxu0 0
  %113 = vmatmul.mubr.bf16.gmra.mxu0 %v69
  %v114 = vpop.f32.mrf.mxu0
  %v115 = vadd.f32 0.0, %v114
  %v116 = vpop.f32.mrf.mxu0
  %v117 = vpop.f32.mrf.mxu0
  %v118 = vadd.f32 0.0, %v117
  %v119 = vpop.f32.mrf.mxu0
  %120 = vmatprep.mubr.bf16.mxu0 0
  %121 = vmatmul.mubr.bf16.gmra.mxu0 %v72
  %v122 = vpop.f32.mrf.mxu0
  %v123 = vadd.f32 0.0, %v122
  %v124 = vpop.f32.mrf.mxu0
  %v125 = vpop.f32.mrf.mxu0
  %v126 = vadd.f32 0.0, %v125
  %v127 = vpop.f32.mrf.mxu0
  %128 = vmatprep.mubr.bf16.mxu0 0
  %129 = vmatmul.mubr.bf16.gmra.mxu0 %v75
  %v130 = vpop.f32.mrf.mxu0
  %v131 = vadd.f32 0.0, %v130
  %v132 = vpop.f32.mrf.mxu0
  %v133 = vpop.f32.mrf.mxu0
  %v134 = vadd.f32 0.0, %v133
  %v135 = vpop.f32.mrf.mxu0
  %136 = vmatprep.mubr.bf16.mxu0 0
  %137 = vmatmul.mubr.bf16.gmra.mxu0 %v78
  %v138 = vpop.f32.mrf.mxu0
  %v139 = vadd.f32 0.0, %v138
  %v140 = vpop.f32.mrf.mxu0
  %v141 = vpop.f32.mrf.mxu0
  %v142 = vadd.f32 0.0, %v141
  %v143 = vpop.f32.mrf.mxu0
  %144 = vdwg.mxu0
  %145 = vmatprep.subr.bf16.mxu0 0
  %146 = vmatpush1.bf16.msra.mxu0 0
  %147 = vmatprep.subr.bf16.mxu0 0
  %148 = vmatpush1.bf16.msra.mxu0 0
  %149 = vmatprep.subr.bf16.mxu0 0
  %150 = vmatpush1.bf16.msra.mxu0 0
  %151 = vmatprep.subr.bf16.mxu0 0
  %152 = vmatpush1.bf16.msra.mxu0 0
  %153 = vmatprep.subr.bf16.mxu0 0
  %154 = vmatpush1.bf16.msra.mxu0 0
  %155 = vmatprep.subr.bf16.mxu0 0
  %156 = vmatpush1.bf16.msra.mxu0 0
  %157 = vmatprep.subr.bf16.mxu0 0
  %158 = vmatpush1.bf16.msra.mxu0 0
  %159 = vmatprep.subr.bf16.mxu0 0
  %160 = vmatpush1.bf16.msra.mxu0 %v41
  %161 = vmatprep.subr.bf16.mxu0 0
  %162 = vmatpush2.bf16.msra.mxu0 0
  %163 = vmatprep.subr.bf16.mxu0 0
  %164 = vmatpush2.bf16.msra.mxu0 0
  %165 = vmatprep.subr.bf16.mxu0 0
  %166 = vmatpush2.bf16.msra.mxu0 0
  %167 = vmatprep.subr.bf16.mxu0 0
  %168 = vmatpush2.bf16.msra.mxu0 0
  %169 = vmatprep.subr.bf16.mxu0 0
  %170 = vmatpush2.bf16.msra.mxu0 0
  %171 = vmatprep.subr.bf16.mxu0 0
  %172 = vmatpush2.bf16.msra.mxu0 0
  %173 = vmatprep.subr.bf16.mxu0 0
  %174 = vmatpush2.bf16.msra.mxu0 0
  %175 = vmatprep.subr.bf16.mxu0 0
  %176 = vmatpush2.bf16.msra.mxu0 0
  %177 = vmatprep.mubr.bf16.mxu0 0
  %178 = vmatmul.mubr.bf16.gmra.mxu0 %v69
  %v179 = vpop.f32.mrf.mxu0
  %v180 = vadd.f32 %v115, %v179
  %v181 = vpop.f32.mrf.mxu0
  %v182 = vpop.f32.mrf.mxu0
  %v183 = vadd.f32 %v118, %v182
  %v184 = vpop.f32.mrf.mxu0
  %185 = vmatprep.mubr.bf16.mxu0 0
  %186 = vmatmul.mubr.bf16.gmra.mxu0 %v72
  %v187 = vpop.f32.mrf.mxu0
  %v188 = vadd.f32 %v123, %v187
  %v189 = vpop.f32.mrf.mxu0
  %v190 = vpop.f32.mrf.mxu0
  %v191 = vadd.f32 %v126, %v190
  %v192 = vpop.f32.mrf.mxu0
  %193 = vmatprep.mubr.bf16.mxu0 0
  %194 = vmatmul.mubr.bf16.gmra.mxu0 %v75
  %v195 = vpop.f32.mrf.mxu0
  %v196 = vadd.f32 %v131, %v195
  %v197 = vpop.f32.mrf.mxu0
  %v198 = vpop.f32.mrf.mxu0
  %v199 = vadd.f32 %v134, %v198
  %v200 = vpop.f32.mrf.mxu0
  %201 = vmatprep.mubr.bf16.mxu0 0
  %202 = vmatmul.mubr.bf16.gmra.mxu0 %v78
  %v203 = vpop.f32.mrf.mxu0
  %v204 = vadd.f32 %v139, %v203
  %v205 = vpop.f32.mrf.mxu0
  %v206 = vpop.f32.mrf.mxu0
  %v207 = vadd.f32 %v142, %v206
  %v208 = vpop.f32.mrf.mxu0
  %209 = vdwg.mxu0
  %v211 = vsel %vm67, %v58, 0
  %v214 = vsel %vm67, %v59, 0
  %v217 = vsel %vm67, %v60, 0
  %v220 = vsel %vm67, %v61, 0
  %222 = vmatprep.subr.bf16.mxu0 0
  %223 = vmatpush1.bf16.msra.mxu0 0
  %224 = vmatprep.subr.bf16.mxu0 0
  %225 = vmatpush1.bf16.msra.mxu0 0
  %226 = vmatprep.subr.bf16.mxu0 0
  %227 = vmatpush1.bf16.msra.mxu0 0
  %228 = vmatprep.subr.bf16.mxu0 0
  %229 = vmatpush1.bf16.msra.mxu0 0
  %230 = vmatprep.subr.bf16.mxu0 0
  %231 = vmatpush1.bf16.msra.mxu0 0
  %232 = vmatprep.subr.bf16.mxu0 0
  %233 = vmatpush1.bf16.msra.mxu0 0
  %234 = vmatprep.subr.bf16.mxu0 0
  %235 = vmatpush1.bf16.msra.mxu0 0
  %236 = vmatprep.subr.bf16.mxu0 0
  %237 = vmatpush1.bf16.msra.mxu0 %v41
  %238 = vmatprep.subr.bf16.mxu0 0
  %239 = vmatpush2.bf16.msra.mxu0 0
  %240 = vmatprep.subr.bf16.mxu0 0
  %241 = vmatpush2.bf16.msra.mxu0 0
  %242 = vmatprep.subr.bf16.mxu0 0
  %243 = vmatpush2.bf16.msra.mxu0 0
  %244 = vmatprep.subr.bf16.mxu0 0
  %245 = vmatpush2.bf16.msra.mxu0 0
  %246 = vmatprep.subr.bf16.mxu0 0
  %247 = vmatpush2.bf16.msra.mxu0 0
  %248 = vmatprep.subr.bf16.mxu0 0
  %249 = vmatpush2.bf16.msra.mxu0 0
  %250 = vmatprep.subr.bf16.mxu0 0
  %251 = vmatpush2.bf16.msra.mxu0 0
  %252 = vmatprep.subr.bf16.mxu0 0
  %253 = vmatpush2.bf16.msra.mxu0 0
  %254 = vmatprep.mubr.bf16.mxu0 0
  %255 = vmatmul.mubr.bf16.gmra.mxu0 %v211
  %v256 = vpop.f32.mrf.mxu0
  %v257 = vadd.f32 0.0, %v256
  %v258 = vpop.f32.mrf.mxu0
  %v259 = vpop.f32.mrf.mxu0
  %v260 = vadd.f32 0.0, %v259
  %v261 = vpop.f32.mrf.mxu0
  %262 = vmatprep.mubr.bf16.mxu0 0
  %263 = vmatmul.mubr.bf16.gmra.mxu0 %v214
  %v264 = vpop.f32.mrf.mxu0
  %v265 = vadd.f32 0.0, %v264
  %v266 = vpop.f32.mrf.mxu0
  %v267 = vpop.f32.mrf.mxu0
  %v268 = vadd.f32 0.0, %v267
  %v269 = vpop.f32.mrf.mxu0
  %270 = vmatprep.mubr.bf16.mxu0 0
  %271 = vmatmul.mubr.bf16.gmra.mxu0 %v217
  %v272 = vpop.f32.mrf.mxu0
  %v273 = vadd.f32 0.0, %v272
  %v274 = vpop.f32.mrf.mxu0
  %v275 = vpop.f32.mrf.mxu0
  %v276 = vadd.f32 0.0, %v275
  %v277 = vpop.f32.mrf.mxu0
  %278 = vmatprep.mubr.bf16.mxu0 0
  %279 = vmatmul.mubr.bf16.gmra.mxu0 %v220
  %v280 = vpop.f32.mrf.mxu0
  %v281 = vadd.f32 0.0, %v280
  %v282 = vpop.f32.mrf.mxu0
  %v283 = vpop.f32.mrf.mxu0
  %v284 = vadd.f32 0.0, %v283
  %v285 = vpop.f32.mrf.mxu0
  %286 = vdwg.mxu0
  %v287 = vadd.f32 %v180, %v257
  %v288 = vadd.f32 %v183, %v260
  %v289 = vadd.f32 %v188, %v265
  %v290 = vadd.f32 %v191, %v268
  %v291 = vadd.f32 %v196, %v273
  %v292 = vadd.f32 %v199, %v276
  %v293 = vadd.f32 %v204, %v281
  %v294 = vadd.f32 %v207, %v284
  %v295 = vld [vmem:[%s2] sm:$0xff]
  %v296 = vld [vmem:[%s2 + $0x8] sm:$0xff]
  %v297 = vld [vmem:[%s2 + $0x10] sm:$0xff]
  %v298 = vld [vmem:[%s2 + $0x18] sm:$0xff]
  %v299 = vld [vmem:[%s2 + $0x20] sm:$0xff]
  %v300 = vld [vmem:[%s2 + $0x28] sm:$0xff]
  %v301 = vld [vmem:[%s2 + $0x30] sm:$0xff]
  %v302 = vld [vmem:[%s2 + $0x38] sm:$0xff]
  %304 = vset.pattern.permute.xlu0 0
  %305 = vperm.xlu0 %304, %v295
  %v306 = vpop.permute.xlu0 %305
  %309 = vset.pattern.permute.xlu0 0
  %310 = vperm.xlu0 %309, %v296
  %v311 = vpop.permute.xlu0 %310
  %314 = vset.pattern.permute.xlu0 0
  %315 = vperm.xlu0 %314, %v297
  %v316 = vpop.permute.xlu0 %315
  %319 = vset.pattern.permute.xlu0 0
  %320 = vperm.xlu0 %319, %v298
  %v321 = vpop.permute.xlu0 %320
  %324 = vset.pattern.permute.xlu0 0
  %325 = vperm.xlu0 %324, %v299
  %v326 = vpop.permute.xlu0 %325
  %329 = vset.pattern.permute.xlu0 0
  %330 = vperm.xlu0 %329, %v300
  %v331 = vpop.permute.xlu0 %330
  %334 = vset.pattern.permute.xlu0 0
  %335 = vperm.xlu0 %334, %v301
  %v336 = vpop.permute.xlu0 %335
  %339 = vset.pattern.permute.xlu0 0
  %340 = vperm.xlu0 %339, %v302
  %v341 = vpop.permute.xlu0 %340
  %v343 = vadd.f32 %v287, %v306
  %v344 = vadd.f32 %v288, %v311
  %v345 = vadd.f32 %v289, %v316
  %v346 = vadd.f32 %v290, %v321
  %v347 = vadd.f32 %v291, %v326
  %v348 = vadd.f32 %v292, %v331
  %v349 = vadd.f32 %v293, %v336
  %v350 = vadd.f32 %v294, %v341
  %v351 = vmax.f32 %v343, 0.0
  %v352 = vmax.f32 %v344, 0.0
  %v353 = vmax.f32 %v345, 0.0
  %v354 = vmax.f32 %v346, 0.0
  %v355 = vmax.f32 %v347, 0.0
  %v356 = vmax.f32 %v348, 0.0
  %v357 = vmax.f32 %v349, 0.0
  %v358 = vmax.f32 %v350, 0.0
  %v359 = vld [vmem:[%s3] sm:$0xff]
  %v360 = vld [vmem:[%s3 + $0x8] sm:$0xff]
  %v361 = vld [vmem:[%s3 + $0x10] sm:$0xff]
  %v362 = vld [vmem:[%s3 + $0x18] sm:$0xff]
  %v363 = vpack.c.bf16 %v360, %v359
  %v364 = vpack.c.bf16 %v362, %v361
  %v365 = vpack.c.bf16 %v352, %v351
  %v366 = vpack.c.bf16 %v354, %v353
  %v367 = vpack.c.bf16 %v356, %v355
  %v368 = vpack.c.bf16 %v358, %v357
  %v369 = vunpack.c.l.bf16 %v363
  %v370 = vunpack.c.h.bf16 %v363
  %v371 = vunpack.c.l.bf16 %v364
  %v372 = vunpack.c.h.bf16 %v364
  %v373 = vsub.f32 %v359, %v369
  %v374 = vsub.f32 %v360, %v370
  %v375 = vsub.f32 %v361, %v371
  %v376 = vsub.f32 %v362, %v372
  %v377 = vpack.c.bf16 %v374, %v373
  %v378 = vpack.c.bf16 %v376, %v375
  %v379 = vunpack.c.l.bf16 %v365
  %v380 = vunpack.c.h.bf16 %v365
  %v381 = vunpack.c.l.bf16 %v366
  %v382 = vunpack.c.h.bf16 %v366
  %v383 = vunpack.c.l.bf16 %v367
  %v384 = vunpack.c.h.bf16 %v367
  %v385 = vunpack.c.l.bf16 %v368
  %v386 = vunpack.c.h.bf16 %v368
  %v387 = vsub.f32 %v351, %v379
  %v388 = vsub.f32 %v352, %v380
  %v389 = vsub.f32 %v353, %v381
  %v390 = vsub.f32 %v354, %v382
  %v391 = vsub.f32 %v355, %v383
  %v392 = vsub.f32 %v356, %v384
  %v393 = vsub.f32 %v357, %v385
  %v394 = vsub.f32 %v358, %v386
  %v395 = vpack.c.bf16 %v388, %v387
  %v396 = vpack.c.bf16 %v390, %v389
  %v397 = vpack.c.bf16 %v392, %v391
  %v398 = vpack.c.bf16 %v394, %v393
  %vm399 = vcmask 523264
  %v401 = vsel %vm399, %v363, 0
  %v404 = vsel %vm399, %v364, 0
  %406 = vmatprep.subr.bf16.mxu0 0
  %407 = vmatpush1.bf16.msra.mxu0 0
  %408 = vmatprep.subr.bf16.mxu0 0
  %409 = vmatpush1.bf16.msra.mxu0 0
  %410 = vmatprep.subr.bf16.mxu0 0
  %411 = vmatpush1.bf16.msra.mxu0 0
  %412 = vmatprep.subr.bf16.mxu0 0
  %413 = vmatpush1.bf16.msra.mxu0 0
  %414 = vmatprep.subr.bf16.mxu0 0
  %415 = vmatpush1.bf16.msra.mxu0 %v398
  %416 = vmatprep.subr.bf16.mxu0 0
  %417 = vmatpush1.bf16.msra.mxu0 %v397
  %418 = vmatprep.subr.bf16.mxu0 0
  %419 = vmatpush1.bf16.msra.mxu0 %v396
  %420 = vmatprep.subr.bf16.mxu0 0
  %421 = vmatpush1.bf16.msra.mxu0 %v395
  %422 = vmatprep.subr.bf16.mxu0 0
  %423 = vmatpush2.bf16.msra.mxu0 0
  %424 = vmatprep.subr.bf16.mxu0 0
  %425 = vmatpush2.bf16.msra.mxu0 0
  %426 = vmatprep.subr.bf16.mxu0 0
  %427 = vmatpush2.bf16.msra.mxu0 0
  %428 = vmatprep.subr.bf16.mxu0 0
  %429 = vmatpush2.bf16.msra.mxu0 0
  %430 = vmatprep.subr.bf16.mxu0 0
  %431 = vmatpush2.bf16.msra.mxu0 0
  %432 = vmatprep.subr.bf16.mxu0 0
  %433 = vmatpush2.bf16.msra.mxu0 0
  %434 = vmatprep.subr.bf16.mxu0 0
  %435 = vmatpush2.bf16.msra.mxu0 0
  %436 = vmatprep.subr.bf16.mxu0 0
  %437 = vmatpush2.bf16.msra.mxu0 0
  %438 = vmatprep.mubr.bf16.mxu0 0
  %439 = vmatmul.mubr.bf16.gmra.mxu0 %v401
  %v440 = vpop.f32.mrf.mxu0
  %v441 = vadd.f32 0.0, %v440
  %v442 = vpop.f32.mrf.mxu0
  %v443 = vpop.f32.mrf.mxu0
  %v444 = vadd.f32 0.0, %v443
  %v445 = vpop.f32.mrf.mxu0
  %446 = vmatprep.mubr.bf16.mxu0 0
  %447 = vmatmul.mubr.bf16.gmra.mxu0 %v404
  %v448 = vpop.f32.mrf.mxu0
  %v449 = vadd.f32 0.0, %v448
  %v450 = vpop.f32.mrf.mxu0
  %v451 = vpop.f32.mrf.mxu0
  %v452 = vadd.f32 0.0, %v451
  %v453 = vpop.f32.mrf.mxu0
  %454 = vdwg.mxu0
  %455 = vmatprep.subr.bf16.mxu0 0
  %456 = vmatpush1.bf16.msra.mxu0 0
  %457 = vmatprep.subr.bf16.mxu0 0
  %458 = vmatpush1.bf16.msra.mxu0 0
  %459 = vmatprep.subr.bf16.mxu0 0
  %460 = vmatpush1.bf16.msra.mxu0 0
  %461 = vmatprep.subr.bf16.mxu0 0
  %462 = vmatpush1.bf16.msra.mxu0 0
  %463 = vmatprep.subr.bf16.mxu0 0
  %464 = vmatpush1.bf16.msra.mxu0 %v368
  %465 = vmatprep.subr.bf16.mxu0 0
  %466 = vmatpush1.bf16.msra.mxu0 %v367
  %467 = vmatprep.subr.bf16.mxu0 0
  %468 = vmatpush1.bf16.msra.mxu0 %v366
  %469 = vmatprep.subr.bf16.mxu0 0
  %470 = vmatpush1.bf16.msra.mxu0 %v365
  %471 = vmatprep.subr.bf16.mxu0 0
  %472 = vmatpush2.bf16.msra.mxu0 0
  %473 = vmatprep.subr.bf16.mxu0 0
  %474 = vmatpush2.bf16.msra.mxu0 0
  %475 = vmatprep.subr.bf16.mxu0 0
  %476 = vmatpush2.bf16.msra.mxu0 0
  %477 = vmatprep.subr.bf16.mxu0 0
  %478 = vmatpush2.bf16.msra.mxu0 0
  %479 = vmatprep.subr.bf16.mxu0 0
  %480 = vmatpush2.bf16.msra.mxu0 0
  %481 = vmatprep.subr.bf16.mxu0 0
  %482 = vmatpush2.bf16.msra.mxu0 0
  %483 = vmatprep.subr.bf16.mxu0 0
  %484 = vmatpush2.bf16.msra.mxu0 0
  %485 = vmatprep.subr.bf16.mxu0 0
  %486 = vmatpush2.bf16.msra.mxu0 0
  %487 = vmatprep.mubr.bf16.mxu0 0
  %488 = vmatmul.mubr.bf16.gmra.mxu0 %v401
  %v489 = vpop.f32.mrf.mxu0
  %v490 = vadd.f32 %v441, %v489
  %v491 = vpop.f32.mrf.mxu0
  %v492 = vpop.f32.mrf.mxu0
  %v493 = vadd.f32 %v444, %v492
  %v494 = vpop.f32.mrf.mxu0
  %495 = vmatprep.mubr.bf16.mxu0 0
  %496 = vmatmul.mubr.bf16.gmra.mxu0 %v404
  %v497 = vpop.f32.mrf.mxu0
  %v498 = vadd.f32 %v449, %v497
  %v499 = vpop.f32.mrf.mxu0
  %v500 = vpop.f32.mrf.mxu0
  %v501 = vadd.f32 %v452, %v500
  %v502 = vpop.f32.mrf.mxu0
  %503 = vdwg.mxu0
  %v505 = vsel %vm399, %v377, 0
  %v508 = vsel %vm399, %v378, 0
  %510 = vmatprep.subr.bf16.mxu0 0
  %511 = vmatpush1.bf16.msra.mxu0 0
  %512 = vmatprep.subr.bf16.mxu0 0
  %513 = vmatpush1.bf16.msra.mxu0 0
  %514 = vmatprep.subr.bf16.mxu0 0
  %515 = vmatpush1.bf16.msra.mxu0 0
  %516 = vmatprep.subr.bf16.mxu0 0
  %517 = vmatpush1.bf16.msra.mxu0 0
  %518 = vmatprep.subr.bf16.mxu0 0
  %519 = vmatpush1.bf16.msra.mxu0 %v368
  %520 = vmatprep.subr.bf16.mxu0 0
  %521 = vmatpush1.bf16.msra.mxu0 %v367
  %522 = vmatprep.subr.bf16.mxu0 0
  %523 = vmatpush1.bf16.msra.mxu0 %v366
  %524 = vmatprep.subr.bf16.mxu0 0
  %525 = vmatpush1.bf16.msra.mxu0 %v365
  %526 = vmatprep.subr.bf16.mxu0 0
  %527 = vmatpush2.bf16.msra.mxu0 0
  %528 = vmatprep.subr.bf16.mxu0 0
  %529 = vmatpush2.bf16.msra.mxu0 0
  %530 = vmatprep.subr.bf16.mxu0 0
  %531 = vmatpush2.bf16.msra.mxu0 0
  %532 = vmatprep.subr.bf16.mxu0 0
  %533 = vmatpush2.bf16.msra.mxu0 0
  %534 = vmatprep.subr.bf16.mxu0 0
  %535 = vmatpush2.bf16.msra.mxu0 0
  %536 = vmatprep.subr.bf16.mxu0 0
  %537 = vmatpush2.bf16.msra.mxu0 0
  %538 = vmatprep.subr.bf16.mxu0 0
  %539 = vmatpush2.bf16.msra.mxu0 0
  %540 = vmatprep.subr.bf16.mxu0 0
  %541 = vmatpush2.bf16.msra.mxu0 0
  %542 = vmatprep.mubr.bf16.mxu0 0
  %543 = vmatmul.mubr.bf16.gmra.mxu0 %v505
  %v544 = vpop.f32.mrf.mxu0
  %v545 = vadd.f32 0.0, %v544
  %v546 = vpop.f32.mrf.mxu0
  %v547 = vpop.f32.mrf.mxu0
  %v548 = vadd.f32 0.0, %v547
  %v549 = vpop.f32.mrf.mxu0
  %550 = vmatprep.mubr.bf16.mxu0 0
  %551 = vmatmul.mubr.bf16.gmra.mxu0 %v508
  %v552 = vpop.f32.mrf.mxu0
  %v553 = vadd.f32 0.0, %v552
  %v554 = vpop.f32.mrf.mxu0
  %v555 = vpop.f32.mrf.mxu0
  %v556 = vadd.f32 0.0, %v555
  %v557 = vpop.f32.mrf.mxu0
  %558 = vdwg.mxu0
  %v559 = vadd.f32 %v490, %v545
  %v560 = vadd.f32 %v493, %v548
  %v561 = vadd.f32 %v498, %v553
  %v562 = vadd.f32 %v501, %v556
  %v563 = vld [vmem:[%s4] sm:$0xff]
  %v564 = vld [vmem:[%s4 + $0x8] sm:$0xff]
  %v565 = vld [vmem:[%s4 + $0x10] sm:$0xff]
  %v566 = vld [vmem:[%s4 + $0x18] sm:$0xff]
  %568 = vset.pattern.permute.xlu0 0
  %569 = vperm.xlu0 %568, %v563
  %v570 = vpop.permute.xlu0 %569
  %573 = vset.pattern.permute.xlu0 0
  %574 = vperm.xlu0 %573, %v564
  %v575 = vpop.permute.xlu0 %574
  %578 = vset.pattern.permute.xlu0 0
  %579 = vperm.xlu0 %578, %v565
  %v580 = vpop.permute.xlu0 %579
  %583 = vset.pattern.permute.xlu0 0
  %584 = vperm.xlu0 %583, %v566
  %v585 = vpop.permute.xlu0 %584
  %v587 = vadd.f32 %v559, %v570
  %v588 = vadd.f32 %v560, %v575
  %v589 = vadd.f32 %v561, %v580
  %v590 = vadd.f32 %v562, %v585
  %v591 = vmax.f32 %v587, 0.0
  %v592 = vmax.f32 %v588, 0.0
  %v593 = vmax.f32 %v589, 0.0
  %v594 = vmax.f32 %v590, 0.0
  %v595 = vld [vmem:[%s5] sm:$0xf]
  %v596 = vpack.c.bf16 %v595, %v595
  %v597 = vpack.c.bf16 %v592, %v591
  %v598 = vpack.c.bf16 %v594, %v593
  %v599 = vunpack.c.l.bf16 %v596
  %v600 = vsub.f32 %v595, %v599
  %v601 = vpack.c.bf16 %v600, %v600
  %v602 = vunpack.c.l.bf16 %v597
  %v603 = vunpack.c.h.bf16 %v597
  %v604 = vunpack.c.l.bf16 %v598
  %v605 = vunpack.c.h.bf16 %v598
  %v606 = vsub.f32 %v591, %v602
  %v607 = vsub.f32 %v592, %v603
  %v608 = vsub.f32 %v593, %v604
  %v609 = vsub.f32 %v594, %v605
  %v610 = vpack.c.bf16 %v607, %v606
  %v611 = vpack.c.bf16 %v609, %v608
  %vm612 = vcmask 261120
  %v614 = vsel %vm612, %v596, 0
  %616 = vmatprep.subr.bf16.mxu0 0
  %617 = vmatpush1.bf16.msra.mxu0 0
  %618 = vmatprep.subr.bf16.mxu0 0
  %619 = vmatpush1.bf16.msra.mxu0 0
  %620 = vmatprep.subr.bf16.mxu0 0
  %621 = vmatpush1.bf16.msra.mxu0 0
  %622 = vmatprep.subr.bf16.mxu0 0
  %623 = vmatpush1.bf16.msra.mxu0 0
  %624 = vmatprep.subr.bf16.mxu0 0
  %625 = vmatpush1.bf16.msra.mxu0 0
  %626 = vmatprep.subr.bf16.mxu0 0
  %627 = vmatpush1.bf16.msra.mxu0 0
  %628 = vmatprep.subr.bf16.mxu0 0
  %629 = vmatpush1.bf16.msra.mxu0 %v611
  %630 = vmatprep.subr.bf16.mxu0 0
  %631 = vmatpush1.bf16.msra.mxu0 %v610
  %632 = vmatprep.subr.bf16.mxu0 0
  %633 = vmatpush2.bf16.msra.mxu0 0
  %634 = vmatprep.subr.bf16.mxu0 0
  %635 = vmatpush2.bf16.msra.mxu0 0
  %636 = vmatprep.subr.bf16.mxu0 0
  %637 = vmatpush2.bf16.msra.mxu0 0
  %638 = vmatprep.subr.bf16.mxu0 0
  %639 = vmatpush2.bf16.msra.mxu0 0
  %640 = vmatprep.subr.bf16.mxu0 0
  %641 = vmatpush2.bf16.msra.mxu0 0
  %642 = vmatprep.subr.bf16.mxu0 0
  %643 = vmatpush2.bf16.msra.mxu0 0
  %644 = vmatprep.subr.bf16.mxu0 0
  %645 = vmatpush2.bf16.msra.mxu0 0
  %646 = vmatprep.subr.bf16.mxu0 0
  %647 = vmatpush2.bf16.msra.mxu0 0
  %648 = vmatprep.mubr.bf16.mxu0 0
  %649 = vmatmul.mubr.bf16.gmra.mxu0 %v614
  %v650 = vpop.f32.mrf.mxu0
  %v651 = vadd.f32 0.0, %v650
  %v652 = vpop.f32.mrf.mxu0
  %v653 = vpop.f32.mrf.mxu0
  %v654 = vpop.f32.mrf.mxu0
  %655 = vdwg.mxu0
  %656 = vmatprep.subr.bf16.mxu0 0
  %657 = vmatpush1.bf16.msra.mxu0 0
  %658 = vmatprep.subr.bf16.mxu0 0
  %659 = vmatpush1.bf16.msra.mxu0 0
  %660 = vmatprep.subr.bf16.mxu0 0
  %661 = vmatpush1.bf16.msra.mxu0 0
  %662 = vmatprep.subr.bf16.mxu0 0
  %663 = vmatpush1.bf16.msra.mxu0 0
  %664 = vmatprep.subr.bf16.mxu0 0
  %665 = vmatpush1.bf16.msra.mxu0 0
  %666 = vmatprep.subr.bf16.mxu0 0
  %667 = vmatpush1.bf16.msra.mxu0 0
  %668 = vmatprep.subr.bf16.mxu0 0
  %669 = vmatpush1.bf16.msra.mxu0 %v598
  %670 = vmatprep.subr.bf16.mxu0 0
  %671 = vmatpush1.bf16.msra.mxu0 %v597
  %672 = vmatprep.subr.bf16.mxu0 0
  %673 = vmatpush2.bf16.msra.mxu0 0
  %674 = vmatprep.subr.bf16.mxu0 0
  %675 = vmatpush2.bf16.msra.mxu0 0
  %676 = vmatprep.subr.bf16.mxu0 0
  %677 = vmatpush2.bf16.msra.mxu0 0
  %678 = vmatprep.subr.bf16.mxu0 0
  %679 = vmatpush2.bf16.msra.mxu0 0
  %680 = vmatprep.subr.bf16.mxu0 0
  %681 = vmatpush2.bf16.msra.mxu0 0
  %682 = vmatprep.subr.bf16.mxu0 0
  %683 = vmatpush2.bf16.msra.mxu0 0
  %684 = vmatprep.subr.bf16.mxu0 0
  %685 = vmatpush2.bf16.msra.mxu0 0
  %686 = vmatprep.subr.bf16.mxu0 0
  %687 = vmatpush2.bf16.msra.mxu0 0
  %688 = vmatprep.mubr.bf16.mxu0 0
  %689 = vmatmul.mubr.bf16.gmra.mxu0 %v614
  %v690 = vpop.f32.mrf.mxu0
  %v691 = vadd.f32 %v651, %v690
  %v692 = vpop.f32.mrf.mxu0
  %v693 = vpop.f32.mrf.mxu0
  %v694 = vpop.f32.mrf.mxu0
  %695 = vdwg.mxu0
  %v697 = vsel %vm612, %v601, 0
  %699 = vmatprep.subr.bf16.mxu0 0
  %700 = vmatpush1.bf16.msra.mxu0 0
  %701 = vmatprep.subr.bf16.mxu0 0
  %702 = vmatpush1.bf16.msra.mxu0 0
  %703 = vmatprep.subr.bf16.mxu0 0
  %704 = vmatpush1.bf16.msra.mxu0 0
  %705 = vmatprep.subr.bf16.mxu0 0
  %706 = vmatpush1.bf16.msra.mxu0 0
  %707 = vmatprep.subr.bf16.mxu0 0
  %708 = vmatpush1.bf16.msra.mxu0 0
  %709 = vmatprep.subr.bf16.mxu0 0
  %710 = vmatpush1.bf16.msra.mxu0 0
  %711 = vmatprep.subr.bf16.mxu0 0
  %712 = vmatpush1.bf16.msra.mxu0 %v598
  %713 = vmatprep.subr.bf16.mxu0 0
  %714 = vmatpush1.bf16.msra.mxu0 %v597
  %715 = vmatprep.subr.bf16.mxu0 0
  %716 = vmatpush2.bf16.msra.mxu0 0
  %717 = vmatprep.subr.bf16.mxu0 0
  %718 = vmatpush2.bf16.msra.mxu0 0
  %719 = vmatprep.subr.bf16.mxu0 0
  %720 = vmatpush2.bf16.msra.mxu0 0
  %721 = vmatprep.subr.bf16.mxu0 0
  %722 = vmatpush2.bf16.msra.mxu0 0
  %723 = vmatprep.subr.bf16.mxu0 0
  %724 = vmatpush2.bf16.msra.mxu0 0
  %725 = vmatprep.subr.bf16.mxu0 0
  %726 = vmatpush2.bf16.msra.mxu0 0
  %727 = vmatprep.subr.bf16.mxu0 0
  %728 = vmatpush2.bf16.msra.mxu0 0
  %729 = vmatprep.subr.bf16.mxu0 0
  %730 = vmatpush2.bf16.msra.mxu0 0
  %731 = vmatprep.mubr.bf16.mxu0 0
  %732 = vmatmul.mubr.bf16.gmra.mxu0 %v697
  %v733 = vpop.f32.mrf.mxu0
  %v734 = vadd.f32 0.0, %v733
  %v735 = vpop.f32.mrf.mxu0
  %v736 = vpop.f32.mrf.mxu0
  %v737 = vpop.f32.mrf.mxu0
  %738 = vdwg.mxu0
  %v739 = vadd.f32 %v691, %v734
  %v740 = vld [vmem:[%s6] sm:$0xf]
  %742 = vset.pattern.permute.xlu0 0
  %743 = vperm.xlu0 %742, %v740
  %v744 = vpop.permute.xlu0 %743
  %v746 = vadd.f32 %v739, %v744
  %vm747 = vcmask 11264
  %748 = vst.msk [vmem:[%s7] sm:$0xf] %vm747, %v746
  // Predicated region
  $region30: #{tpu_custom_call.1} parent=0 // pred_check
    _
  $region31: #{tpu_custom_call.1} parent=0 // pred_check_branch
    %750 = sbr.rel (0) target = $region33
  $region32: #{tpu_custom_call.1} parent=0 // pred_region
    _
  $region33: #{tpu_custom_call.1} parent=0 // pred_fallthru
    _
  // Predicated region
  $region34: #{tpu_custom_call.1} parent=0 // pred_check
    _
  $region35: #{tpu_custom_call.1} parent=0 // pred_check_branch
    %752 = sbr.rel (0) target = $region37
  $region36: #{tpu_custom_call.1} parent=0 // pred_region
    _
  $region37: #{tpu_custom_call.1} parent=0 // pred_fallthru
    _

</llo_original>
